<compile_context>
chip_gen: v7x
topology: tpu7x:2x2x1
jax: 0.10.0
libtpu: 0.0.40
codegen_flags: <defaults>
</compile_context>

<pallas_src>
import functools

import jax
import jax.numpy as jnp
from jax import lax
from jax.experimental import pallas as pl
from jax.experimental.pallas import tpu as pltpu


_LANE = 128                       # channel dims are zero-padded to this width
_ROW_GROUP = 8                    # gather rows per inner step (one f32 sublane group)
_VMEM_LIMIT = 48 * 1024 * 1024    # explicit scoped-VMEM limit (safe on v7x)


def _round_up(x, m):
    return ((x + m - 1) // m) * m


# -----------------------------------------------------------------------------
# Kernel 1: nn1  --  h = ReLU(x @ W1 + b1), streamed once per node (not per
# gathered neighbor), fully parallel grid.
# -----------------------------------------------------------------------------
def _nn1_kernel(x_ref, w1_ref, b1_ref, h_ref):
    h = jnp.dot(x_ref[...], w1_ref[...], preferred_element_type=jnp.float32)
    h_ref[...] = jnp.maximum(h + b1_ref[...], 0.0)


# -----------------------------------------------------------------------------
# Kernel 2: in-VMEM neighbor gather + max_k + fused nn2 + sigmoid
# -----------------------------------------------------------------------------
def _sage_kernel(idx_ref,           # SMEM (scalar prefetch): flat neighbor ids
                 h_ref,             # VMEM (1, n_pad, C_pad)  resident per batch
                 x_ref,             # VMEM (1, tile_m, C_pad) node-tile features
                 w2_ref,            # VMEM (2*C_pad, C_out_pad) stacked nn2 weight
                 b2_ref,            # VMEM (1, C_out_pad)
                 out_ref,           # VMEM (1, tile_m, C_out_pad)
                 cat_ref,           # VMEM scratch (tile_m, 2*C_pad): [x | max_k h_j]
                 *, n_pad, tile_m, k_nbrs):
    b = pl.program_id(0)
    i = pl.program_id(1)
    c_pad = cat_ref.shape[1] // 2

    # flat offset (into idx_ref) of the first neighbor id of this node tile
    tile_base = (b * n_pad + i * tile_m) * k_nbrs

    # left half of the fused-nn2 input: the tile's own (padded) features
    cat_ref[:, pl.ds(0, c_pad)] = x_ref[0]

    # sublane index used to place each gathered row inside an (8, C_pad) tile
    sub = lax.broadcasted_iota(jnp.int32, (_ROW_GROUP, c_pad), 0)

    def gather_group(g, carry):
        base = tile_base + g * (_ROW_GROUP * k_nbrs)
        acc = jnp.zeros((_ROW_GROUP, c_pad), jnp.float32)
        for r in range(_ROW_GROUP):                       # 8 rows per step -> ILP
            # K independent full-lane single-row loads from the resident h
            vals = [h_ref[0, pl.ds(idx_ref[base + r * k_nbrs + kk], 1), :]
                    for kk in range(k_nbrs)]
            # pairwise tree max over K (depth ceil(log2 K), not a serial chain)
            while len(vals) > 1:
                nxt = [jnp.maximum(vals[2 * j], vals[2 * j + 1])
                       for j in range(len(vals) // 2)]
                if len(vals) % 2:
                    nxt.append(vals[-1])
                vals = nxt
            # place row r into the (8, C_pad) register tile (VPU select; avoids
            # 8 masked single-row stores -- only one aligned store per group)
            acc = jnp.where(sub == r,
                            jnp.broadcast_to(vals[0], (_ROW_GROUP, c_pad)), acc)
        row0 = pl.multiple_of(g * _ROW_GROUP, _ROW_GROUP)
        # single aligned (8, C_pad) store into the right half of the nn2 input
        cat_ref[pl.ds(row0, _ROW_GROUP), pl.ds(c_pad, c_pad)] = acc
        return carry

    lax.fori_loop(0, tile_m // _ROW_GROUP, gather_group, 0)

    # fused nn2: one (tile_m, 2*C_pad) @ (2*C_pad, C_out_pad) matmul + bias
    z = jnp.dot(cat_ref[...], w2_ref[...],
                preferred_element_type=jnp.float32) + b2_ref[...]
    out_ref[0] = jax.nn.sigmoid(jnp.maximum(z, 0.0)).astype(out_ref.dtype)


# -----------------------------------------------------------------------------
# Wrapper
# -----------------------------------------------------------------------------
def graphsage2_forward(x_nchw, edge_index, w1, b1, w2, b2, *, tile_m=512):
    """x: (B, C, N, 1) f32; edge_index: (2, B, N, K) int; w2: (2C, C_out).

    Returns sigmoid(ReLU(cat([x, max_k ReLU(x_j W1 + b1)]) W2 + b2)) in NCHW,
    shape (B, C_out, N, 1).
    """
    B, C, N, _ = x_nchw.shape
    K = int(edge_index.shape[-1])
    C_out = int(w2.shape[1])

    # node tile: large (amortizes per-grid-step overhead), multiple of the
    # 8-row gather group, clamped to N; N padded up to a multiple of tile_m.
    tile_m = int(min(int(tile_m), max(_ROW_GROUP, N)))
    tile_m = max(_ROW_GROUP, (tile_m // _ROW_GROUP) * _ROW_GROUP)
    n_pad = _round_up(max(N, tile_m), tile_m)
    n_tiles = n_pad // tile_m

    # channel padding to full lane width (128): lane-dense loads/stores and
    # MXU-aligned contractions on every generation.
    c_pad = _round_up(C, _LANE)
    c_out_pad = _round_up(C_out, _LANE)

    # node-major activations (B, n_pad, C_pad); the NCHW->BNC transpose stays
    # in XLA (single pass, tiny next to the fused in-VMEM gather savings).
    x_bnc = jnp.transpose(x_nchw[..., 0], (0, 2, 1)).astype(jnp.float32)
    x_bnc = jnp.pad(x_bnc, ((0, 0), (0, n_pad - N), (0, c_pad - C)))

    idx = edge_index[0].astype(jnp.int32)
    idx = jnp.pad(idx, ((0, 0), (0, n_pad - N), (0, 0)))   # padded rows gather node 0
    idx_flat = idx.reshape(-1)

    # zero-padded parameters (padded rows/cols contribute nothing; padded
    # output channels / node rows are sliced off at the end).
    w1_p = jnp.zeros((c_pad, c_pad), jnp.float32).at[:C, :C].set(w1)
    b1_p = jnp.zeros((1, c_pad), jnp.float32).at[0, :C].set(b1)
    w2_p = (jnp.zeros((2 * c_pad, c_out_pad), jnp.float32)
            .at[:C, :C_out].set(w2[:C])                    # x half of cat
            .at[c_pad:c_pad + C, :C_out].set(w2[C:]))      # x_j half of cat
    b2_p = jnp.zeros((1, c_out_pad), jnp.float32).at[0, :C_out].set(b2)

    # ---- pass 1: h = ReLU(x @ W1 + b1), fully parallel streaming kernel -----
    x2d = x_bnc.reshape(B * n_pad, c_pad)
    h2d = pl.pallas_call(
        _nn1_kernel,
        out_shape=jax.ShapeDtypeStruct((B * n_pad, c_pad), jnp.float32),
        grid=(B * n_pad // tile_m,),
        in_specs=[
            pl.BlockSpec((tile_m, c_pad), lambda g: (g, 0)),
            pl.BlockSpec((c_pad, c_pad), lambda g: (0, 0)),
            pl.BlockSpec((1, c_pad), lambda g: (0, 0)),
        ],
        out_specs=pl.BlockSpec((tile_m, c_pad), lambda g: (g, 0)),
        compiler_params=pltpu.CompilerParams(
            dimension_semantics=("parallel",),
            vmem_limit_bytes=_VMEM_LIMIT),
    )(x2d, w1_p, b1_p)
    h_bnc = h2d.reshape(B, n_pad, c_pad)

    # ---- pass 2: gather + max_k + fused nn2 + sigmoid ------------------------
    kernel = functools.partial(_sage_kernel, n_pad=n_pad, tile_m=tile_m, k_nbrs=K)
    out_pad = pl.pallas_call(
        kernel,
        out_shape=jax.ShapeDtypeStruct((B, n_pad, c_out_pad), jnp.float32),
        grid_spec=pltpu.PrefetchScalarGridSpec(
            num_scalar_prefetch=1,                         # neighbor ids -> SMEM
            grid=(B, n_tiles),
            in_specs=[
                pl.BlockSpec((1, n_pad, c_pad), lambda b, i, ids: (b, 0, 0)),    # h resident
                pl.BlockSpec((1, tile_m, c_pad), lambda b, i, ids: (b, i, 0)),   # x tile
                pl.BlockSpec((2 * c_pad, c_out_pad), lambda b, i, ids: (0, 0)),  # W2 stacked
                pl.BlockSpec((1, c_out_pad), lambda b, i, ids: (0, 0)),          # b2
            ],
            out_specs=pl.BlockSpec((1, tile_m, c_out_pad),
                                   lambda b, i, ids: (b, i, 0)),
            scratch_shapes=[pltpu.VMEM((tile_m, 2 * c_pad), jnp.float32)],
        ),
        compiler_params=pltpu.CompilerParams(
            # h is a read-only input (not recomputed scratch), so BOTH axes are
            # parallel: node tiles split across cores even when B == 1 or odd.
            dimension_semantics=("parallel", "parallel"),
            vmem_limit_bytes=_VMEM_LIMIT),
    )(idx_flat, h_bnc, x_bnc, w2_p, b2_p)

    out = out_pad[:, :N, :C_out]                       # drop node / channel padding
    return jnp.transpose(out, (0, 2, 1))[..., None]    # NCHW (B, C_out, N, 1)


# -----------------------------------------------------------------------------
# Plain-JAX reference mirroring the PyTorch forward
# -----------------------------------------------------------------------------
def graphsage2_reference(x_nchw, edge_index, w1, b1, w2, b2):
    x_bnc = jnp.transpose(x_nchw[..., 0], (0, 2, 1))           # (B, N, C)
    idx = edge_index[0]
    xj = jax.vmap(lambda feat, ind: feat[ind])(x_bnc, idx)     # (B, N, K, C)
    h = jnp.maximum(xj @ w1 + b1, 0.0)                         # nn1 + ReLU
    h_max = jnp.max(h, axis=2)                                 # max over K
    cat = jnp.concatenate([x_bnc, h_max], axis=-1)             # (B, N, 2C)
    z = jnp.maximum(cat @ w2 + b2, 0.0)                        # nn2 + ReLU
    out = jax.nn.sigmoid(z)
    return jnp.transpose(out, (0, 2, 1))[..., None]            # (B, C_out, N, 1)


if __name__ == "__main__":
    B, C, N, K, C_out = 2, 4, 16, 8, 8

    key = jax.random.PRNGKey(0)
    kx, ke, k1, kb1, k2, kb2 = jax.random.split(key, 6)

    x = jax.random.normal(kx, (B, C, N, 1), dtype=jnp.float32)
    # edge_index[0]: neighbor indices in [0, N); edge_index[1]: center node ids
    idx = jax.random.randint(ke, (B, N, K), 0, N, dtype=jnp.int32)
    edge_index = jnp.stack(
        [idx,
         jnp.broadcast_to(jnp.arange(N, dtype=jnp.int32)[None, :, None], (B, N, K))],
        axis=0)

    # deterministic synthetic parameters (1x1 convs as channel matmuls)
    w1 = jax.random.normal(k1, (C, C), dtype=jnp.float32) * 0.3
    b1 = jax.random.normal(kb1, (C,), dtype=jnp.float32) * 0.1
    # nn2: 1x1 conv over the 2C concatenated channels -> stacked (2C, C_out)
    w2 = jax.random.normal(k2, (2 * C, C_out), dtype=jnp.float32) * 0.3
    b2 = jax.random.normal(kb2, (C_out,), dtype=jnp.float32) * 0.1

    out = graphsage2_forward(x, edge_index, w1, b1, w2, b2)
    out = jax.block_until_ready(out)

    ref = graphsage2_reference(x, edge_index, w1, b1, w2, b2)
    assert out.shape == (B, C_out, N, 1)
    assert jnp.allclose(out, ref, atol=1e-5, rtol=1e-5), \
        float(jnp.max(jnp.abs(out - ref)))

    print("KERNEL_OK")
</pallas_src>

<mosaic_0001>
module attributes {stable_mosaic.version = 11 : i64} {
  func.func @_nn1_kernel(%arg0: i32, %arg1: memref<16x128xf32, #tpu.memory_space<vmem>>, %arg2: memref<128x128xf32, #tpu.memory_space<vmem>>, %arg3: memref<1x128xf32, #tpu.memory_space<vmem>>, %arg4: memref<16x128xf32, #tpu.memory_space<vmem>>) attributes {dimension_semantics = [#tpu.dimension_semantics<parallel>], iteration_bounds = array<i64: 2>, scalar_prefetch = 0 : i64, scratch_operands = 0 : i64, tpu.core_type = #tpu.core_type<tc>, window_params = [{transform_indices = @transform_0, window_bounds = array<i64: 16, 128>}, {pipeline_mode = #tpu.pipeline_mode<synchronous>, transform_indices = @transform_1, window_bounds = array<i64: 128, 128>}, {pipeline_mode = #tpu.pipeline_mode<synchronous>, transform_indices = @transform_2, window_bounds = array<i64: 1, 128>}, {transform_indices = @transform_3, window_bounds = array<i64: 16, 128>}]} {
    %c0 = arith.constant 0 : index
    %c0_0 = arith.constant 0 : index
    %0 = vector.load %arg1[%c0, %c0_0] : memref<16x128xf32, #tpu.memory_space<vmem>>, vector<16x128xf32>
    %c0_1 = arith.constant 0 : index
    %c0_2 = arith.constant 0 : index
    %1 = vector.load %arg2[%c0_1, %c0_2] : memref<128x128xf32, #tpu.memory_space<vmem>>, vector<128x128xf32>
    %cst = arith.constant dense<0.000000e+00> : vector<16x128xf32>
    %2 = tpu.matmul %0, %1, %cst {dimension_numbers = #tpu.dot_dimension_numbers<[1], [0], [0], [1], [0, 0, 1, 1], [], []>} : vector<16x128xf32>, vector<128x128xf32>, vector<16x128xf32> -> vector<16x128xf32>
    %c0_3 = arith.constant 0 : index
    %c0_4 = arith.constant 0 : index
    %3 = vector.load %arg3[%c0_3, %c0_4] : memref<1x128xf32, #tpu.memory_space<vmem>>, vector<1x128xf32>
    %4 = vector.broadcast %3 : vector<1x128xf32> to vector<16x128xf32>
    %5 = arith.addf %2, %4 : vector<16x128xf32>
    %cst_5 = arith.constant 0.000000e+00 : f32
    %6 = vector.broadcast %cst_5 : f32 to vector<16x128xf32>
    %7 = arith.maximumf %5, %6 : vector<16x128xf32>
    %c0_6 = arith.constant 0 : index
    %c0_7 = arith.constant 0 : index
    %8 = vector.load %arg4[%c0_6, %c0_7] : memref<16x128xf32, #tpu.memory_space<vmem>>, vector<16x128xf32>
    tpu.vector_store %arg4[%c0_6, %c0_7], %7 {strides = array<i32>} : memref<16x128xf32, #tpu.memory_space<vmem>>, vector<16x128xf32>,
    return
  }
  func.func @transform_0(%arg0: i32) -> (i32, i32) {
    %c0_i32 = arith.constant 0 : i32
    %c0_i32_0 = arith.constant 0 : i32
    return %arg0, %c0_i32 : i32, i32
  }
  func.func @transform_1(%arg0: i32) -> (i32, i32) {
    %c0_i32 = arith.constant 0 : i32
    %c0_i32_0 = arith.constant 0 : i32
    %c0_i32_1 = arith.constant 0 : i32
    return %c0_i32, %c0_i32_0 : i32, i32
  }
  func.func @transform_2(%arg0: i32) -> (i32, i32) {
    %c0_i32 = arith.constant 0 : i32
    %c0_i32_0 = arith.constant 0 : i32
    %c0_i32_1 = arith.constant 0 : i32
    return %c0_i32, %c0_i32_0 : i32, i32
  }
  func.func @transform_3(%arg0: i32) -> (i32, i32) {
    %c0_i32 = arith.constant 0 : i32
    %c0_i32_0 = arith.constant 0 : i32
    return %arg0, %c0_i32 : i32, i32
  }
}

</mosaic_0001>

<llo_original>
// kernel: tpu_custom_call.1
$region0: #{tpu_custom_call.1}
  #allocation0 [shape = 'u32[]', space=smem, size = 0x4, offset = 0x4, fixed_abs, tag = 'smem constant byte address 0x4 - core index']
  #allocation1 [shape = 'u32[144,128]{1,0:T(1,128)}', space=vmem, size = 0x12000, scoped, tag = 'internal scratch']
  %s0 = inlined_call_operand.hbm [shape: f32[32,128], index: 0, kind: input, shape index: {}]
  %s1 = inlined_call_operand.hbm [shape: f32[128,128], index: 1, kind: input, shape index: {}]
  %s2 = inlined_call_operand.vmem [shape: f32[1,128], index: 2, kind: input, shape index: {}]
  %s3 = inlined_call_operand.hbm [shape: f32[32,128], index: 3, kind: output, shape index: {}]
  %s4 = sld [smem:[#allocation0]]
  $region53: #{tpu_custom_call.1} parent=0
    _
  %s6 = ssub.s32 1, %s4
  %s7 = scalar_select 0, %s6, %s4
  $region1: #{tpu_custom_call.1} parent=0
    #allocation2 [shape = 'u8[16384]{0}', space=vmem, size = 0x4000, scoped, tag = 'input window, operand 0']
    #allocation3 [shape = 's32[2]{0}', space=sflag, size = 0x8, scoped, tag = 'scoped memory for tpu_custom_call.1']
    #allocation4 [shape = 's32[2]{0}', space=sflag, size = 0x8, scoped, tag = 'scoped memory for tpu_custom_call.1']
    #allocation5 [shape = 'u8[65536]{0}', space=vmem, size = 0x10000, scoped, tag = 'input window, operand 1, single buffered']
    #allocation6 [shape = 's32[1]{0}', space=sflag, size = 0x4, scoped, tag = 'scoped memory for tpu_custom_call.1']
    #allocation7 [shape = 'u8[16384]{0}', space=vmem, size = 0x4000, scoped, tag = 'output window, operand 0']
    %8 = vsyncpa [#allocation3], 0
    %s9 = scalar_lea.sflag [#allocation3], 1
    %10 = vsyncpa %s9, 0
    %11 = vsyncpa [#allocation6], 0
    %12 = vsyncpa [#allocation4], 0
    %s13 = scalar_lea.sflag [#allocation4], 1
    %14 = vsyncpa %s13, 0
    loop: start=0, step=1, limit=4
    $region2: #{tpu_custom_call.1} parent=1 // loop_pre_header
      _
    $region3: #{tpu_custom_call.1} parent=1 // loop_header
      %s16 = sphi 0, %s20
      %p17 = scmp.ge.s32.totalorder %s16, 4
      %s26 = sphi 0, %s28
      %s29 = sphi 0, %s26
      %s30 = sphi 0, %s29
      %s46 = sphi 0, %s30
      %s50 = sphi 0, %s50
      %s52 = sphi 0, %s50
      %s53 = sphi 0, %s52
      %s67 = sphi 0, %s53
      %s71 = sphi 0, %s71
      %s73 = sphi 0, %s71
      %s74 = sphi 0, %s73
      %s88 = sphi 0, %s74
      %s94 = sphi 0, %s96
      %s97 = sphi 0, %s94
      %s98 = sphi 0, %s97
      %s114 = sphi 0, %s98
    $region4: #{tpu_custom_call.1} parent=1 // loop_header_branch
      %19 = sbr.rel (%p17) target = $region8
    $region5: #{tpu_custom_call.1} parent=1 // loop_body
      %s21 = ssub.s32 %s16, 1
      %s22 = ssub.s32 %s16, 2
      %s23 = sadd.s32 %s16, 1
      %s24 = ssub.s32 %s16, %s23
      %p25 = scmp.eq.s32.totalorder %s24, 0
      %s27 = sadd.s32 %s26, 1
      %s28 = scalar_select %p25, %s26, %s27
      %p31 = pneg %p25
      %p32 = scmp.eq.s32.totalorder %s16, 1
      %p33 = por %p31, %p32
      %p34 = scmp.ne.s32.totalorder %s26, %s29
      %p35 = scmp.eq.s32.totalorder %s16, 0
      %p36 = por %p34, %p35
      %p37 = scmp.ne.s32.totalorder %s26, %s29
      %p38 = scmp.eq.s32.totalorder %s21, 1
      %p39 = por %p37, %p38
      %p40 = scmp.ne.s32.totalorder %s29, %s30
      %p41 = scmp.eq.s32.totalorder %s21, 0
      %p42 = por %p40, %p41
      %p43 = scmp.ne.s32.totalorder %s29, %s30
      %p44 = scmp.eq.s32.totalorder %s22, 1
      %p45 = por %p43, %p44
      %p47 = scmp.ne.s32.totalorder %s30, %s46
      %p48 = scmp.eq.s32.totalorder %s22, 0
      %p49 = por %p47, %p48
      %s51 = sadd.s32 %s50, 1
      %p54 = scmp.eq.s32.totalorder %s16, 1
      %p55 = scmp.ne.s32.totalorder %s50, %s52
      %p56 = scmp.eq.s32.totalorder %s16, 0
      %p57 = por %p55, %p56
      %p58 = scmp.ne.s32.totalorder %s50, %s52
      %p59 = scmp.eq.s32.totalorder %s21, 1
      %p60 = por %p58, %p59
      %p61 = scmp.ne.s32.totalorder %s52, %s53
      %p62 = scmp.eq.s32.totalorder %s21, 0
      %p63 = por %p61, %p62
      %p64 = scmp.ne.s32.totalorder %s52, %s53
      %p65 = scmp.eq.s32.totalorder %s22, 1
      %p66 = por %p64, %p65
      %p68 = scmp.ne.s32.totalorder %s53, %s67
      %p69 = scmp.eq.s32.totalorder %s22, 0
      %p70 = por %p68, %p69
      %s72 = sadd.s32 %s71, 1
      %p75 = scmp.eq.s32.totalorder %s16, 1
      %p76 = scmp.ne.s32.totalorder %s71, %s73
      %p77 = scmp.eq.s32.totalorder %s16, 0
      %p78 = por %p76, %p77
      %p79 = scmp.ne.s32.totalorder %s71, %s73
      %p80 = scmp.eq.s32.totalorder %s21, 1
      %p81 = por %p79, %p80
      %p82 = scmp.ne.s32.totalorder %s73, %s74
      %p83 = scmp.eq.s32.totalorder %s21, 0
      %p84 = por %p82, %p83
      %p85 = scmp.ne.s32.totalorder %s73, %s74
      %p86 = scmp.eq.s32.totalorder %s22, 1
      %p87 = por %p85, %p86
      %p89 = scmp.ne.s32.totalorder %s74, %s88
      %p90 = scmp.eq.s32.totalorder %s22, 0
      %p91 = por %p89, %p90
      %s92 = ssub.s32 %s16, %s23
      %p93 = scmp.eq.s32.totalorder %s92, 0
      %s95 = sadd.s32 %s94, 1
      %s96 = scalar_select %p93, %s94, %s95
      %p99 = pneg %p93
      %p100 = scmp.eq.s32.totalorder %s16, 1
      %p101 = por %p99, %p100
      %p102 = scmp.ne.s32.totalorder %s94, %s97
      %p103 = scmp.eq.s32.totalorder %s16, 0
      %p104 = por %p102, %p103
      %p105 = scmp.ne.s32.totalorder %s94, %s97
      %p106 = scmp.eq.s32.totalorder %s21, 1
      %p107 = por %p105, %p106
      %p108 = scmp.ne.s32.totalorder %s97, %s98
      %p109 = scmp.eq.s32.totalorder %s21, 0
      %p110 = por %p108, %p109
      %p111 = scmp.ne.s32.totalorder %s97, %s98
      %p112 = scmp.eq.s32.totalorder %s22, 1
      %p113 = por %p111, %p112
      %p115 = scmp.ne.s32.totalorder %s98, %s114
      %p116 = scmp.eq.s32.totalorder %s22, 0
      %p117 = por %p115, %p116
      %p118 = scmp.le.s32.totalorder 1, %s16
      %p119 = scmp.lt.s32.totalorder %s16, 3
      %p120 = pnand %p118, %p119
      %p121 = pneg %p120
      // Predicated region
      $region9: #{tpu_custom_call.1} parent=5 // pred_check
        _
      $region10: #{tpu_custom_call.1} parent=5 // pred_check_branch
        %123 = sbr.rel (%p120) target = $region12
      $region11: #{tpu_custom_call.1} parent=5 // pred_region
        %s124 = ssub.s32 %s16, 1
        // Predicated region
        $region13: #{tpu_custom_call.1} parent=11 // pred_check
          %p125 = pneg %p63
        $region14: #{tpu_custom_call.1} parent=11 // pred_check_branch
          %127 = sbr.rel (%p125) target = $region16
        $region15: #{tpu_custom_call.1} parent=11 // pred_region
          %s129 = ssub.s32 2048, 2048
          %130 = vsyncadd [#allocation6], %s129
          %s131 = sshll.u32 [#allocation5], 4
          %s132 = int_to_ptr.vmem [resolvable:$true] %s131
          %137 = dma.hbm_to_vmem [thread:$0]  %s1, 2048, %s132, [#allocation6], 128, 128, 8
        $region16: #{tpu_custom_call.1} parent=11 // pred_fallthru
          _
        // Predicated region
        $region17: #{tpu_custom_call.1} parent=11 // pred_check
          %p138 = pneg %p84
        $region18: #{tpu_custom_call.1} parent=11 // pred_check_branch
          %140 = sbr.rel (%p138) target = $region20
        $region19: #{tpu_custom_call.1} parent=11 // pred_region
          _
        $region20: #{tpu_custom_call.1} parent=11 // pred_fallthru
          _
      $region12: #{tpu_custom_call.1} parent=5 // pred_fallthru
        _
      %p141 = scmp.lt.s32.totalorder %s16, 2
      // Predicated region
      $region21: #{tpu_custom_call.1} parent=5 // pred_check
        %p142 = pneg %p141
      $region22: #{tpu_custom_call.1} parent=5 // pred_check_branch
        %144 = sbr.rel (%p142) target = $region24
      $region23: #{tpu_custom_call.1} parent=5 // pred_region
        // Predicated region
        $region25: #{tpu_custom_call.1} parent=23 // pred_check
          %p145 = pneg %p36
        $region26: #{tpu_custom_call.1} parent=23 // pred_check_branch
          %147 = sbr.rel (%p145) target = $region28
        $region27: #{tpu_custom_call.1} parent=23 // pred_region
          %s148 = sand.u32 %s26, 1
          %s149 = scalar_lea.sflag [#allocation3], %s148
          %s150 = sand.u32 %s26, 1
          %s151 = smul.addr %s150, 16
          %s152 = scalar_lea.vmem [#allocation2], %s151
          %s153 = smul.u32 2, %s16
          %s155 = ssub.s32 256, 256
          %156 = vsyncadd %s149, %s155
          %s157 = smul.addr %s153, 128
          %s158 = scalar_lea.hbm %s0, %s157
          %s159 = sshll.u32 %s152, 4
          %s160 = int_to_ptr.vmem [resolvable:$true] %s159
          %165 = dma.hbm_to_vmem [thread:$0]  %s158, 256, %s160, %s149, 128, 128, 8
        $region28: #{tpu_custom_call.1} parent=23 // pred_fallthru
          _
      $region24: #{tpu_custom_call.1} parent=5 // pred_fallthru
        _
      %p166 = scmp.le.s32.totalorder 1, %s16
      %p167 = scmp.lt.s32.totalorder %s16, 3
      %p168 = pnand %p166, %p167
      %p169 = pneg %p168
      // Predicated region
      $region29: #{tpu_custom_call.1} parent=5 // pred_check
        _
      $region30: #{tpu_custom_call.1} parent=5 // pred_check_branch
        %171 = sbr.rel (%p168) target = $region32
      $region31: #{tpu_custom_call.1} parent=5 // pred_region
        %s172 = ssub.s32 %s16, 1
        %s173 = sand.u32 %s29, 1
        %s174 = scalar_lea.sflag [#allocation3], %s173
        %s175 = sand.u32 %s29, 1
        %s176 = smul.addr %s175, 16
        %s177 = scalar_lea.vmem [#allocation2], %s176
        // Predicated region
        $region33: #{tpu_custom_call.1} parent=31 // pred_check
          %p178 = pneg %p42
        $region34: #{tpu_custom_call.1} parent=31 // pred_check_branch
          %180 = sbr.rel (%p178) target = $region36
        $region35: #{tpu_custom_call.1} parent=31 // pred_region
          %181 = dma.done %s174, 256
        $region36: #{tpu_custom_call.1} parent=31 // pred_fallthru
          _
        // Predicated region
        $region37: #{tpu_custom_call.1} parent=31 // pred_check
          %p182 = pneg %p63
        $region38: #{tpu_custom_call.1} parent=31 // pred_check_branch
          %184 = sbr.rel (%p182) target = $region40
        $region39: #{tpu_custom_call.1} parent=31 // pred_region
          %185 = dma.done [#allocation6], 2048
        $region40: #{tpu_custom_call.1} parent=31 // pred_fallthru
          _
        %s186 = sand.u32 %s29, 1
        %s187 = scalar_lea.sflag [#allocation3], %s186
        %s188 = sand.u32 %s29, 1
        %s189 = smul.addr %s188, 16
        %s190 = scalar_lea.vmem [#allocation2], %s189
        %p191 = pneg %p42
        %p192 = pneg %p39
        %p193 = pneg %p63
        %p194 = pneg %p60
        %p195 = pneg %p84
        %p196 = pneg %p81
        %p197 = pneg %p110
        %p198 = pneg %p107
        %s199 = sand.u32 %s97, 1
        %s200 = scalar_lea.sflag [#allocation4], %s199
        %s201 = sand.u32 %s97, 1
        %s202 = smul.addr %s201, 16
        %s203 = scalar_lea.vmem [#allocation7], %s202
        %s204 = smul.u32 2, %s21
        %s205 = smul.u32 2, %s21
        %v206 = vld [vmem:[%s177] sm:$0xff]
        %v207 = vld [vmem:[%s177 + $0x8] sm:$0xff]
        %v208 = vld [vmem:[#allocation5] sm:$0xff]
        %v209 = vld [vmem:[#allocation5 + $0x8] sm:$0xff]
        %v210 = vld [vmem:[#allocation5 + $0x10] sm:$0xff]
        %v211 = vld [vmem:[#allocation5 + $0x18] sm:$0xff]
        %v212 = vld [vmem:[#allocation5 + $0x20] sm:$0xff]
        %v213 = vld [vmem:[#allocation5 + $0x28] sm:$0xff]
        %v214 = vld [vmem:[#allocation5 + $0x30] sm:$0xff]
        %v215 = vld [vmem:[#allocation5 + $0x38] sm:$0xff]
        %v216 = vld [vmem:[#allocation5 + $0x40] sm:$0xff]
        %v217 = vld [vmem:[#allocation5 + $0x48] sm:$0xff]
        %v218 = vld [vmem:[#allocation5 + $0x50] sm:$0xff]
        %v219 = vld [vmem:[#allocation5 + $0x58] sm:$0xff]
        %v220 = vld [vmem:[#allocation5 + $0x60] sm:$0xff]
        %v221 = vld [vmem:[#allocation5 + $0x68] sm:$0xff]
        %v222 = vld [vmem:[#allocation5 + $0x70] sm:$0xff]
        %v223 = vld [vmem:[#allocation5 + $0x78] sm:$0xff]
        %v224 = vld [vmem:[%s2] sm:$0x1]
        %v226 = vlaneseq
        %v227 = vshrl.u32 %v226, 7
        %v228 = vsub.s32 0, %v227
        %v229 = vrot.slane %v224, %v228
        %231 = vmatprep.subr.mxu0 0.0
        %232 = vmatpush1.msra.mxu0 %v208
        %233 = vmatprep.subr.mxu0 0.0
        %234 = vmatpush1.msra.mxu0 %v209
        %235 = vmatprep.subr.mxu0 0.0
        %236 = vmatpush1.msra.mxu0 %v210
        %237 = vmatprep.subr.mxu0 0.0
        %238 = vmatpush1.msra.mxu0 %v211
        %239 = vmatprep.subr.mxu0 0.0
        %240 = vmatpush1.msra.mxu0 %v212
        %241 = vmatprep.subr.mxu0 0.0
        %242 = vmatpush1.msra.mxu0 %v213
        %243 = vmatprep.subr.mxu0 0.0
        %244 = vmatpush1.msra.mxu0 %v214
        %245 = vmatprep.subr.mxu0 0.0
        %246 = vmatpush1.msra.mxu0 %v215
        %247 = vmatprep.subr.mxu0 0.0
        %248 = vmatpush1.msra.mxu0 %v216
        %249 = vmatprep.subr.mxu0 0.0
        %250 = vmatpush1.msra.mxu0 %v217
        %251 = vmatprep.subr.mxu0 0.0
        %252 = vmatpush1.msra.mxu0 %v218
        %253 = vmatprep.subr.mxu0 0.0
        %254 = vmatpush1.msra.mxu0 %v219
        %255 = vmatprep.subr.mxu0 0.0
        %256 = vmatpush1.msra.mxu0 %v220
        %257 = vmatprep.subr.mxu0 0.0
        %258 = vmatpush1.msra.mxu0 %v221
        %259 = vmatprep.subr.mxu0 0.0
        %260 = vmatpush1.msra.mxu0 %v222
        %261 = vmatprep.subr.mxu0 0.0
        %262 = vmatpush1.msra.mxu0 %v223
        %263 = vmatprep.subr.mxu0 0.0
        %264 = vmatpush1.msra.mxu0 0.0
        %265 = vmatprep.subr.mxu0 0.0
        %266 = vmatpush1.msra.mxu0 0.0
        %267 = vmatprep.subr.mxu0 0.0
        %268 = vmatpush1.msra.mxu0 0.0
        %269 = vmatprep.subr.mxu0 0.0
        %270 = vmatpush1.msra.mxu0 0.0
        %271 = vmatprep.subr.mxu0 0.0
        %272 = vmatpush1.msra.mxu0 0.0
        %273 = vmatprep.subr.mxu0 0.0
        %274 = vmatpush1.msra.mxu0 0.0
        %275 = vmatprep.subr.mxu0 0.0
        %276 = vmatpush1.msra.mxu0 0.0
        %277 = vmatprep.subr.mxu0 0.0
        %278 = vmatpush1.msra.mxu0 0.0
        %279 = vmatprep.subr.mxu0 0.0
        %280 = vmatpush1.msra.mxu0 0.0
        %281 = vmatprep.subr.mxu0 0.0
        %282 = vmatpush1.msra.mxu0 0.0
        %283 = vmatprep.subr.mxu0 0.0
        %284 = vmatpush1.msra.mxu0 0.0
        %285 = vmatprep.subr.mxu0 0.0
        %286 = vmatpush1.msra.mxu0 0.0
        %287 = vmatprep.subr.mxu0 0.0
        %288 = vmatpush1.msra.mxu0 0.0
        %289 = vmatprep.subr.mxu0 0.0
        %290 = vmatpush1.msra.mxu0 0.0
        %291 = vmatprep.subr.mxu0 0.0
        %292 = vmatpush1.msra.mxu0 0.0
        %293 = vmatprep.subr.mxu0 0.0
        %294 = vmatpush1.msra.mxu0 0.0
        %295 = vmatprep.mubr.f32.mxu0 0.0
        %296 = vmatmul.mubr.f32.gmra.mrb[0].mxu0 %v206
        %v297 = vpop.f32.mrb[0].mxu0
        %v298 = vadd.f32 %v229, %v297
        %v299 = vpop.f32.mrb[0].mxu0
        %300 = vmatprep.mubr.f32.mxu0 0.0
        %301 = vmatmul.mubr.f32.gmra.mrb[0].mxu0 %v207
        %v302 = vpop.f32.mrb[0].mxu0
        %v303 = vadd.f32 %v229, %v302
        %v304 = vpop.f32.mrb[0].mxu0
        %305 = vdwg.mxu0
        %v306 = vmax.f32 %v298, 0.0
        %v307 = vmax.f32 %v303, 0.0
        %308 = vst [vmem:[%s203] sm:$0xff] %v306
        %309 = vst [vmem:[%s203 + $0x8] sm:$0xff] %v307
        %s310 = sand.u32 %s97, 1
        %s311 = scalar_lea.sflag [#allocation4], %s310
        %s312 = sand.u32 %s97, 1
        %s313 = smul.addr %s312, 16
        %s314 = scalar_lea.vmem [#allocation7], %s313
        // Predicated region
        $region41: #{tpu_custom_call.1} parent=31 // pred_check
          %p315 = pneg %p107
        $region42: #{tpu_custom_call.1} parent=31 // pred_check_branch
          %317 = sbr.rel (%p315) target = $region44
        $region43: #{tpu_custom_call.1} parent=31 // pred_region
          %s318 = smul.u32 2, %s21
          %s320 = ssub.s32 256, 256
          %321 = vsyncadd %s311, %s320
          %s322 = smul.addr %s318, 128
          %s323 = scalar_lea.hbm %s3, %s322
          %s324 = sshll.u32 %s314, 4
          %s325 = int_to_ptr.vmem [resolvable:$true] %s324
          %330 = dma.vmem_to_hbm [thread:$0]  %s325, 256, %s323, %s311, 128, 128, 8
        $region44: #{tpu_custom_call.1} parent=31 // pred_fallthru
          _
      $region32: #{tpu_custom_call.1} parent=5 // pred_fallthru
        _
      %p331 = scmp.le.s32.totalorder 2, %s16
      // Predicated region
      $region45: #{tpu_custom_call.1} parent=5 // pred_check
        %p332 = pneg %p331
      $region46: #{tpu_custom_call.1} parent=5 // pred_check_branch
        %334 = sbr.rel (%p332) target = $region48
      $region47: #{tpu_custom_call.1} parent=5 // pred_region
        %s335 = ssub.s32 %s16, 2
        // Predicated region
        $region49: #{tpu_custom_call.1} parent=47 // pred_check
          %p336 = pneg %p113
        $region50: #{tpu_custom_call.1} parent=47 // pred_check_branch
          %338 = sbr.rel (%p336) target = $region52
        $region51: #{tpu_custom_call.1} parent=47 // pred_region
          %s339 = sand.u32 %s98, 1
          %s340 = scalar_lea.sflag [#allocation4], %s339
          %s341 = sand.u32 %s98, 1
          %s342 = smul.addr %s341, 16
          %s343 = scalar_lea.vmem [#allocation7], %s342
          %344 = dma.done %s340, 256
        $region52: #{tpu_custom_call.1} parent=47 // pred_fallthru
          _
      $region48: #{tpu_custom_call.1} parent=5 // pred_fallthru
        _
    $region6: #{tpu_custom_call.1} parent=1 // loop_footer
      %s20 = sadd.s32 1, %s16
    $region7: #{tpu_custom_call.1} parent=1 // loop_footer_branch
      %15 = sbr.rel target = $region3
    $region8: #{tpu_custom_call.1} parent=1 // loop_exit
      _
    %345 = vsyncpa [#allocation3], 1
    %s346 = scalar_lea.sflag [#allocation3], 1
    %347 = vsyncpa %s346, 1
    %348 = vsyncpa [#allocation6], 1
    %349 = vsyncpa [#allocation4], 1
    %s350 = scalar_lea.sflag [#allocation4], 1
    %351 = vsyncpa %s350, 1

</llo_original>
